<compile_context>
chip_gen: v7x
topology: tpu7x:2x2x1
jax: 0.10.0
libtpu: 0.0.40
codegen_flags: <defaults>
</compile_context>

<pallas_src>
import functools
from typing import NamedTuple

import numpy as np
import jax
import jax.numpy as jnp
from jax import lax
from jax.experimental import pallas as pl
from jax.experimental.pallas import tpu as pltpu

LANE = 128


def _ceil_to(n, m):
    return ((n + m - 1) // m) * m


class Dims(NamedTuple):
    E: int
    H: int
    Rm1: int
    Ep: int
    Hp: int
    Rp: int
    NBW: int


# ----------------------------------------------------------------------------
# Kernel
# ----------------------------------------------------------------------------
def summary_kernel(ent_ref, nbcat_ref, hrow_ref, trow_ref, invc_ref,
                   wt_ref, wn_ref, bnode_ref, wrh_ref, wrt_ref, br_ref,
                   wp_ref, bp_ref,
                   pair_ref, score_ref,
                   acc_h, acc_t):
    f32, bf16 = jnp.float32, jnp.bfloat16
    t = pl.program_id(1)
    nt = pl.num_programs(1)
    rtb = acc_h.shape[0]          # pair-row tile
    tblk = nbcat_ref.shape[0]     # T tile

    @pl.when(t == 0)
    def _init():
        acc_h[...] = jnp.zeros_like(acc_h)
        acc_t[...] = jnp.zeros_like(acc_t)

    # --- embedding_bag segment-sum over this T tile ------------------------
    # Segment matrix tile built IN-KERNEL from the O(T) row-id vectors
    # (exact 0/1 in bf16):  seg_h[r, n] == 1  iff neighbor n belongs to the
    # head bag of pair (row_base + r);  padded neighbors carry row id -1.
    row_base = pl.program_id(0) * rtb
    rows = row_base + lax.broadcasted_iota(jnp.int32, (rtb, tblk), 0)
    seg_h = jnp.where(hrow_ref[...] == rows, 1.0, 0.0).astype(bf16)
    seg_t = jnp.where(trow_ref[...] == rows, 1.0, 0.0).astype(bf16)
    nb = nbcat_ref[...]                                   # (tblk, NBW) bf16
    acc_h[...] += jnp.dot(seg_h, nb, preferred_element_type=f32)
    acc_t[...] += jnp.dot(seg_t, nb, preferred_element_type=f32)

    # --- finalize on the last T tile ---------------------------------------
    @pl.when(t == nt - 1)
    def _finalize():
        # mean = sum * (1/count); counts stay exact f32 on the VPU (free slot).
        bag_h = acc_h[...] * invc_ref[0]                  # (rtb, NBW) f32
        bag_t = acc_t[...] * invc_ref[1]

        # transform_layer on head / tail entity embeddings.
        th = jnp.dot(ent_ref[0], wt_ref[...], preferred_element_type=f32)
        ttl = jnp.dot(ent_ref[1], wt_ref[...], preferred_element_type=f32)

        # neighbor_layer with concatenated-K [ent-bag | rel-bag] weight;
        # bias fused on the host as (bt + bn).
        nh = jnp.dot(bag_h.astype(jnp.bfloat16), wn_ref[...],
                     preferred_element_type=f32)
        ntl = jnp.dot(bag_t.astype(jnp.bfloat16), wn_ref[...],
                      preferred_element_type=f32)
        node_h = jnp.maximum(th + nh + bnode_ref[...], 0.0)    # node_activation
        node_t = jnp.maximum(ttl + ntl + bnode_ref[...], 0.0)

        # relation_layer as two accumulated dots (no lane-concat copy, no
        # zero-padded 2*Hp K):  pre = head @ Wr[:, :H].T + tail @ Wr[:, H:].T.
        pre = (jnp.dot(node_h.astype(jnp.bfloat16), wrh_ref[...],
                       preferred_element_type=f32)
               + jnp.dot(node_t.astype(jnp.bfloat16), wrt_ref[...],
                         preferred_element_type=f32)
               + br_ref[...])
        pair = jnp.maximum(pre, 0.0)                           # relation_activation
        pair_ref[...] = pair

        # predict_layer (lane-padded; wrapper slices to num_relations - 1).
        score_ref[...] = (jnp.dot(pair.astype(jnp.bfloat16), wp_ref[...],
                                  preferred_element_type=f32) + bp_ref[...])


# ----------------------------------------------------------------------------
# One-time parameter transform (pad + bf16 cast, done once, not per call)
# ----------------------------------------------------------------------------
def prepare_params(params):
    f32, bf16 = jnp.float32, jnp.bfloat16
    H, E = params["Wt"].shape
    Rm1 = params["Wp"].shape[0]
    Ep, Hp, Rp = _ceil_to(E, LANE), _ceil_to(H, LANE), _ceil_to(Rm1, LANE)
    NBW = 2 * Ep                                   # packed [ent-bag | rel-bag]

    def padr(x, rows, cols):
        return jnp.zeros((rows, cols), f32).at[:x.shape[0], :x.shape[1]].set(x)

    prep = {
        # embedding tables pre-padded to Ep lanes & bf16 so per-call gathers
        # land directly in the kernel layout (single HBM pass).
        "ent_tab": padr(params["entity_table"],
                        params["entity_table"].shape[0], Ep).astype(bf16),
        "rel_tab": padr(params["relation_table"],
                        params["relation_table"].shape[0], Ep).astype(bf16),
        "wt": padr(params["Wt"].T, Ep, Hp).astype(bf16),
        "wn": (jnp.zeros((NBW, Hp), f32)
               .at[:E, :H].set(params["Wn"][:, :E].T)
               .at[Ep:Ep + E, :H].set(params["Wn"][:, E:].T)).astype(bf16),
        "wrh": padr(params["Wr"][:, :H].T, Hp, Hp).astype(bf16),
        "wrt": padr(params["Wr"][:, H:].T, Hp, Hp).astype(bf16),
        "wp": padr(params["Wp"].T, Hp, Rp).astype(bf16),
        "bnode": jnp.zeros((1, Hp), f32).at[0, :H].set(params["bt"] + params["bn"]),
        "br": jnp.zeros((1, Hp), f32).at[0, :H].set(params["br"]),
        "bp": jnp.zeros((1, Rp), f32).at[0, :Rm1].set(params["bp"]),
    }
    return prep, Dims(E=E, H=H, Rm1=Rm1, Ep=Ep, Hp=Hp, Rp=Rp, NBW=NBW)


# ----------------------------------------------------------------------------
# Forward wrapper (one kernel call returns BOTH pair embeddings and scores)
# ----------------------------------------------------------------------------
@functools.partial(jax.jit, static_argnums=(5, 6, 7))
def _summary_forward_jit(entities, nb_e, nb_r, offsets, prep, dims,
                         row_tile, t_tile):
    f32 = jnp.float32
    E, H, Rm1, Ep, Hp, Rp, NBW = dims
    N = entities.shape[0]
    B = N // 2
    T = nb_e.shape[0]
    Bp = _ceil_to(max(B, row_tile), row_tile)
    Tp = _ceil_to(max(T, t_tile), t_tile)

    # ---- per-call glue: all O(B) / O(T) vectors, no dense (2B, T) matrix ---
    # head/tail entity indices: interleaved [h0,t0,h1,t1,...] -> (2, Bp).
    ent_idx = jnp.zeros((2, Bp), jnp.int32).at[:, :B].set(
        entities.reshape(B, 2).T.astype(jnp.int32))
    ent = prep["ent_tab"][ent_idx]                              # (2, Bp, Ep) bf16

    # per-neighbor bag metadata (bag order is interleaved: 2b=head_b, 2b+1=tail_b).
    bag_id = jnp.searchsorted(offsets, jnp.arange(T), side="right") - 1
    pair_id = (bag_id // 2).astype(jnp.int32)
    side = (bag_id % 2).astype(jnp.int32)
    hrow = jnp.full((1, Tp), -1, jnp.int32).at[0, :T].set(
        jnp.where(side == 0, pair_id, -1))
    trow = jnp.full((1, Tp), -1, jnp.int32).at[0, :T].set(
        jnp.where(side == 1, pair_id, -1))

    counts = jnp.diff(jnp.concatenate([offsets.astype(jnp.int32),
                                       jnp.array([T], jnp.int32)]))
    inv = 1.0 / jnp.maximum(counts.astype(f32), 1.0)            # empty bag -> 0 mean
    invc = (jnp.zeros((2, Bp, 1), f32)
            .at[0, :B, 0].set(inv[0::2])
            .at[1, :B, 0].set(inv[1::2]))

    # neighbor embeddings gathered straight from the pre-padded bf16 tables
    # into the packed [ent | rel] layout (padded rows are masked by row id -1).
    nbe_idx = jnp.zeros((Tp,), jnp.int32).at[:T].set(nb_e.astype(jnp.int32))
    nbr_idx = jnp.zeros((Tp,), jnp.int32).at[:T].set(nb_r.astype(jnp.int32))
    nbcat = jnp.concatenate([prep["ent_tab"][nbe_idx],
                             prep["rel_tab"][nbr_idx]], axis=-1)  # (Tp, NBW) bf16

    grid = (Bp // row_tile, Tp // t_tile)
    rB, tT = row_tile, t_tile

    # Advisory cost estimate (lets XLA overlap the surrounding gathers).
    flops = int(2 * 2 * Bp * Tp * NBW            # bag segment-sums (head+tail)
                + 2 * 2 * Bp * Ep * Hp           # transform_layer
                + 2 * 2 * Bp * NBW * Hp          # neighbor_layer
                + 2 * 2 * Bp * Hp * Hp           # relation_layer (2 dots)
                + 2 * Bp * Hp * Rp)              # predict_layer
    bytes_accessed = int(
        ent.size * 2 + nbcat.size * 2 + hrow.size * 4 + trow.size * 4
        + invc.size * 4
        + sum(prep[k].size * 2 for k in ("wt", "wn", "wrh", "wrt", "wp"))
        + sum(prep[k].size * 4 for k in ("bnode", "br", "bp"))
        + Bp * Hp * 4 + Bp * Rp * 4)
    cost = pl.CostEstimate(flops=flops, transcendentals=0,
                           bytes_accessed=bytes_accessed)

    # Explicit VMEM budget from the actual block sizes (double-buffered
    # streams + resident weights + accumulators), clamped for v7x's 64 MiB.
    block_bytes = (2 * rB * Ep * 2 + tT * NBW * 2 + 2 * tT * 4 + 2 * rB * 4
                   + (Ep * Hp + NBW * Hp + 2 * Hp * Hp + Hp * Rp) * 2
                   + (2 * Hp + Rp) * 4 + rB * Hp * 4 + rB * Rp * 4)
    scratch_bytes = 2 * rB * NBW * 4
    vmem_limit = int(min(64 * 2 ** 20,
                         max(16 * 2 ** 20,
                             2 * block_bytes + scratch_bytes + (2 << 20))))

    pair_p, score_p = pl.pallas_call(
        summary_kernel,
        out_shape=(jax.ShapeDtypeStruct((Bp, Hp), f32),
                   jax.ShapeDtypeStruct((Bp, Rp), f32)),
        grid_spec=pltpu.PrefetchScalarGridSpec(
            num_scalar_prefetch=0,
            grid=grid,
            in_specs=[
                pl.BlockSpec((2, rB, Ep), lambda i, t: (0, i, 0)),   # ent (h/t)
                pl.BlockSpec((tT, NBW), lambda i, t: (t, 0)),        # nbcat stream
                pl.BlockSpec((1, tT), lambda i, t: (0, t)),          # head row ids
                pl.BlockSpec((1, tT), lambda i, t: (0, t)),          # tail row ids
                pl.BlockSpec((2, rB, 1), lambda i, t: (0, i, 0)),    # 1/counts
                pl.BlockSpec((Ep, Hp), lambda i, t: (0, 0)),         # Wt
                pl.BlockSpec((NBW, Hp), lambda i, t: (0, 0)),        # Wn (concat-K)
                pl.BlockSpec((1, Hp), lambda i, t: (0, 0)),          # bt + bn
                pl.BlockSpec((Hp, Hp), lambda i, t: (0, 0)),         # Wr head half
                pl.BlockSpec((Hp, Hp), lambda i, t: (0, 0)),         # Wr tail half
                pl.BlockSpec((1, Hp), lambda i, t: (0, 0)),          # br
                pl.BlockSpec((Hp, Rp), lambda i, t: (0, 0)),         # Wp
                pl.BlockSpec((1, Rp), lambda i, t: (0, 0)),          # bp
            ],
            out_specs=(pl.BlockSpec((rB, Hp), lambda i, t: (i, 0)),
                       pl.BlockSpec((rB, Rp), lambda i, t: (i, 0))),
            scratch_shapes=[pltpu.VMEM((rB, NBW), jnp.float32),
                            pltpu.VMEM((rB, NBW), jnp.float32)]),
        compiler_params=pltpu.CompilerParams(
            dimension_semantics=("parallel", "arbitrary"),
            vmem_limit_bytes=vmem_limit),
        cost_estimate=cost,
    )(ent, nbcat, hrow, trow, invc,
      prep["wt"], prep["wn"], prep["bnode"], prep["wrh"], prep["wrt"],
      prep["br"], prep["wp"], prep["bp"])

    return pair_p[:B, :H], score_p[:B, :Rm1]


def summary_forward(entities, neighbor_entities, neighbor_relations, offsets,
                    prep, dims, *, row_tile=8, t_tile=128):
    """Returns (pair_embeddings, scores) from a single kernel call; the caller
    picks one (mirrors Summary.forward's predict flag without a second launch)."""
    return _summary_forward_jit(entities, neighbor_entities, neighbor_relations,
                                offsets, prep, dims, row_tile, t_tile)


# ----------------------------------------------------------------------------
# Pure-JAX f32 reference (follows the PyTorch code literally)
# ----------------------------------------------------------------------------
def reference_forward(entities, neighbor_entities, neighbor_relations, offsets,
                      params):
    ent_tab = params["entity_table"]
    rel_tab = params["relation_table"]
    N = entities.shape[0]
    T = neighbor_entities.shape[0]
    bag_id = jnp.searchsorted(offsets, jnp.arange(T), side="right") - 1
    counts = jnp.maximum(
        jax.ops.segment_sum(jnp.ones((T,), jnp.float32), bag_id, num_segments=N),
        1.0)[:, None]
    bag_e = jax.ops.segment_sum(ent_tab[neighbor_entities], bag_id,
                                num_segments=N) / counts
    bag_r = jax.ops.segment_sum(rel_tab[neighbor_relations], bag_id,
                                num_segments=N) / counts
    ent_emb = ent_tab[entities] @ params["Wt"].T + params["bt"]
    nb = jnp.concatenate([bag_e, bag_r], -1) @ params["Wn"].T + params["bn"]
    node = jnp.maximum(ent_emb + nb, 0.0)
    node2 = node.reshape(N // 2, -1)
    pair = jnp.maximum(node2 @ params["Wr"].T + params["br"], 0.0)
    scores = pair @ params["Wp"].T + params["bp"]
    return pair, scores


def _linear_init(key, out_f, in_f):
    bound = 1.0 / np.sqrt(in_f)
    kw, kb = jax.random.split(key)
    w = jax.random.uniform(kw, (out_f, in_f), jnp.float32, -bound, bound)
    b = jax.random.uniform(kb, (out_f,), jnp.float32, -bound, bound)
    return w, b


if __name__ == "__main__":
    # embed_size=32, hidden_size=32, num_entities=20, num_relations=5
    # (predict_layer outputs 5-1=4), batch_size=2 support pairs.
    E, H, NUM_ENT, NUM_REL, B = 32, 32, 20, 5, 2

    key = jax.random.PRNGKey(0)
    keys = jax.random.split(key, 8)
    params = {}
    params["entity_table"] = jax.random.normal(keys[0], (NUM_ENT, E), jnp.float32)
    params["relation_table"] = jax.random.normal(keys[1], (NUM_REL, E), jnp.float32)
    params["Wn"], params["bn"] = _linear_init(keys[2], H, 2 * E)       # neighbor_layer
    params["Wt"], params["bt"] = _linear_init(keys[3], H, E)           # transform_layer
    params["Wr"], params["br"] = _linear_init(keys[4], H, 2 * H)       # relation_layer
    params["Wp"], params["bp"] = _linear_init(keys[5], NUM_REL - 1, H)  # predict_layer

    # TODO(synk): grapher.KG.my_edges is a host-side Python graph walk with no
    # Pallas equivalent; emulated here by synthetic flat index arrays.
    # support_pairs = [[1, 2], [3, 4]] -> entities interleaved [h0, t0, h1, t1].
    entities = jnp.array([1, 2, 3, 4], dtype=jnp.int32)
    counts = np.array([3, 0, 4, 3])            # neighbors per entity (one empty bag)
    T = int(counts.sum())
    offsets = jnp.array(np.concatenate([[0], np.cumsum(counts)[:-1]]),
                        dtype=jnp.int32)
    neighbor_entities = jax.random.randint(keys[6], (T,), 0, NUM_ENT,
                                           dtype=jnp.int32)
    neighbor_relations = jax.random.randint(keys[7], (T,), 0, NUM_REL,
                                            dtype=jnp.int32)

    prep, dims = prepare_params(params)        # one-time pad + bf16 transform
    pair, scores = summary_forward(entities, neighbor_entities,
                                   neighbor_relations, offsets, prep, dims)
    jax.block_until_ready((pair, scores))

    ref_pair, ref_scores = reference_forward(entities, neighbor_entities,
                                             neighbor_relations, offsets, params)
    # bf16 matmul operands with f32 accumulation -> loosened tolerance vs f32 ref
    # (segment coefficients are exact 0/1 and 1/count scaling stays f32 now).
    np.testing.assert_allclose(np.asarray(pair), np.asarray(ref_pair),
                               rtol=3e-2, atol=3e-2)
    np.testing.assert_allclose(np.asarray(scores), np.asarray(ref_scores),
                               rtol=3e-2, atol=3e-2)

    assert pair.shape == (B, H) and scores.shape == (B, NUM_REL - 1)
    print("KERNEL_OK")
</pallas_src>

<mosaic_0001>
module attributes {stable_mosaic.version = 11 : i64} {
  func.func @summary_kernel(%arg0: i32, %arg1: i32, %arg2: memref<2x8x128xbf16, #tpu.memory_space<vmem>>, %arg3: memref<128x256xbf16, #tpu.memory_space<vmem>>, %arg4: memref<1x128xi32, #tpu.memory_space<vmem>>, %arg5: memref<1x128xi32, #tpu.memory_space<vmem>>, %arg6: memref<2x8x1xf32, #tpu.memory_space<vmem>>, %arg7: memref<128x128xbf16, #tpu.memory_space<vmem>>, %arg8: memref<256x128xbf16, #tpu.memory_space<vmem>>, %arg9: memref<1x128xf32, #tpu.memory_space<vmem>>, %arg10: memref<128x128xbf16, #tpu.memory_space<vmem>>, %arg11: memref<128x128xbf16, #tpu.memory_space<vmem>>, %arg12: memref<1x128xf32, #tpu.memory_space<vmem>>, %arg13: memref<128x128xbf16, #tpu.memory_space<vmem>>, %arg14: memref<1x128xf32, #tpu.memory_space<vmem>>, %arg15: memref<8x128xf32, #tpu.memory_space<vmem>>, %arg16: memref<8x128xf32, #tpu.memory_space<vmem>>, %arg17: memref<8x256xf32, #tpu.memory_space<vmem>>, %arg18: memref<8x256xf32, #tpu.memory_space<vmem>>) attributes {dimension_semantics = [#tpu.dimension_semantics<parallel>, #tpu.dimension_semantics<arbitrary>], iteration_bounds = array<i64: 1, 1>, scalar_prefetch = 0 : i64, scratch_operands = 2 : i64, tpu.core_type = #tpu.core_type<tc>, window_params = [{transform_indices = @transform_0, window_bounds = array<i64: 2, 8, 128>}, {transform_indices = @transform_1, window_bounds = array<i64: 128, 256>}, {transform_indices = @transform_2, window_bounds = array<i64: 1, 128>}, {transform_indices = @transform_3, window_bounds = array<i64: 1, 128>}, {transform_indices = @transform_4, window_bounds = array<i64: 2, 8, 1>}, {pipeline_mode = #tpu.pipeline_mode<synchronous>, transform_indices = @transform_5, window_bounds = array<i64: 128, 128>}, {pipeline_mode = #tpu.pipeline_mode<synchronous>, transform_indices = @transform_6, window_bounds = array<i64: 256, 128>}, {pipeline_mode = #tpu.pipeline_mode<synchronous>, transform_indices = @transform_7, window_bounds = array<i64: 1, 128>}, {pipeline_mode = #tpu.pipeline_mode<synchronous>, transform_indices = @transform_8, window_bounds = array<i64: 128, 128>}, {pipeline_mode = #tpu.pipeline_mode<synchronous>, transform_indices = @transform_9, window_bounds = array<i64: 128, 128>}, {pipeline_mode = #tpu.pipeline_mode<synchronous>, transform_indices = @transform_10, window_bounds = array<i64: 1, 128>}, {pipeline_mode = #tpu.pipeline_mode<synchronous>, transform_indices = @transform_11, window_bounds = array<i64: 128, 128>}, {pipeline_mode = #tpu.pipeline_mode<synchronous>, transform_indices = @transform_12, window_bounds = array<i64: 1, 128>}, {transform_indices = @transform_13, window_bounds = array<i64: 8, 128>}, {transform_indices = @transform_14, window_bounds = array<i64: 8, 128>}]} {
    %c0_i32 = arith.constant 0 : i32
    %0 = arith.cmpi eq, %arg1, %c0_i32 : i32
    %1 = arith.extui %0 : i1 to i32
    %c0_i32_0 = arith.constant 0 : i32
    %2 = arith.cmpi ne, %1, %c0_i32_0 : i32
    scf.if %2 {
      %cst_21 = arith.constant 0.000000e+00 : f32
      %33 = vector.broadcast %cst_21 : f32 to vector<8x256xf32>
      %c0_22 = arith.constant 0 : index
      %c0_23 = arith.constant 0 : index
      %34 = vector.load %arg17[%c0_22, %c0_23] : memref<8x256xf32, #tpu.memory_space<vmem>>, vector<8x256xf32>
      tpu.vector_store %arg17[%c0_22, %c0_23], %33 {strides = array<i32>} : memref<8x256xf32, #tpu.memory_space<vmem>>, vector<8x256xf32>,
      %cst_24 = arith.constant 0.000000e+00 : f32
      %35 = vector.broadcast %cst_24 : f32 to vector<8x256xf32>
      %c0_25 = arith.constant 0 : index
      %c0_26 = arith.constant 0 : index
      %36 = vector.load %arg18[%c0_25, %c0_26] : memref<8x256xf32, #tpu.memory_space<vmem>>, vector<8x256xf32>
      tpu.vector_store %arg18[%c0_25, %c0_26], %35 {strides = array<i32>} : memref<8x256xf32, #tpu.memory_space<vmem>>, vector<8x256xf32>,
    } else {
    }
    %c8_i32 = arith.constant 8 : i32
    %3 = arith.muli %arg0, %c8_i32 : i32
    %4 = tpu.iota {dimensions = array<i32: 0>} : vector<8x128xi32>
    %5 = vector.broadcast %3 : i32 to vector<8x128xi32>
    %6 = arith.addi %5, %4 : vector<8x128xi32>
    %c0 = arith.constant 0 : index
    %c0_1 = arith.constant 0 : index
    %7 = vector.load %arg4[%c0, %c0_1] : memref<1x128xi32, #tpu.memory_space<vmem>>, vector<1x128xi32>
    %8 = vector.broadcast %7 : vector<1x128xi32> to vector<8x128xi32>
    %9 = arith.cmpi eq, %8, %6 : vector<8x128xi32>
    %cst = arith.constant 1.000000e+00 : f32
    %cst_2 = arith.constant 0.000000e+00 : f32
    %10 = vector.broadcast %cst : f32 to vector<8x128xf32>
    %11 = vector.broadcast %cst_2 : f32 to vector<8x128xf32>
    %12 = arith.select %9, %10, %11 : vector<8x128xi1>, vector<8x128xf32>
    %13 = arith.truncf %12 : vector<8x128xf32> to vector<8x128xbf16>
    %c0_3 = arith.constant 0 : index
    %c0_4 = arith.constant 0 : index
    %14 = vector.load %arg5[%c0_3, %c0_4] : memref<1x128xi32, #tpu.memory_space<vmem>>, vector<1x128xi32>
    %15 = vector.broadcast %14 : vector<1x128xi32> to vector<8x128xi32>
    %16 = arith.cmpi eq, %15, %6 : vector<8x128xi32>
    %cst_5 = arith.constant 1.000000e+00 : f32
    %cst_6 = arith.constant 0.000000e+00 : f32
    %17 = vector.broadcast %cst_5 : f32 to vector<8x128xf32>
    %18 = vector.broadcast %cst_6 : f32 to vector<8x128xf32>
    %19 = arith.select %16, %17, %18 : vector<8x128xi1>, vector<8x128xf32>
    %20 = arith.truncf %19 : vector<8x128xf32> to vector<8x128xbf16>
    %c0_7 = arith.constant 0 : index
    %c0_8 = arith.constant 0 : index
    %21 = vector.load %arg3[%c0_7, %c0_8] : memref<128x256xbf16, #tpu.memory_space<vmem>>, vector<128x256xbf16>
    %c0_9 = arith.constant 0 : index
    %c0_10 = arith.constant 0 : index
    %22 = vector.load %arg17[%c0_9, %c0_10] : memref<8x256xf32, #tpu.memory_space<vmem>>, vector<8x256xf32>
    %cst_11 = arith.constant dense<0.000000e+00> : vector<8x256xf32>
    %23 = tpu.matmul %13, %21, %cst_11 {dimension_numbers = #tpu.dot_dimension_numbers<[1], [0], [0], [1], [0, 0, 1, 1], [], []>} : vector<8x128xbf16>, vector<128x256xbf16>, vector<8x256xf32> -> vector<8x256xf32>
    %24 = arith.addf %22, %23 : vector<8x256xf32>
    %c0_12 = arith.constant 0 : index
    %c0_13 = arith.constant 0 : index
    %25 = vector.load %arg17[%c0_12, %c0_13] : memref<8x256xf32, #tpu.memory_space<vmem>>, vector<8x256xf32>
    tpu.vector_store %arg17[%c0_12, %c0_13], %24 {strides = array<i32>} : memref<8x256xf32, #tpu.memory_space<vmem>>, vector<8x256xf32>,
    %c0_14 = arith.constant 0 : index
    %c0_15 = arith.constant 0 : index
    %26 = vector.load %arg18[%c0_14, %c0_15] : memref<8x256xf32, #tpu.memory_space<vmem>>, vector<8x256xf32>
    %cst_16 = arith.constant dense<0.000000e+00> : vector<8x256xf32>
    %27 = tpu.matmul %20, %21, %cst_16 {dimension_numbers = #tpu.dot_dimension_numbers<[1], [0], [0], [1], [0, 0, 1, 1], [], []>} : vector<8x128xbf16>, vector<128x256xbf16>, vector<8x256xf32> -> vector<8x256xf32>
    %28 = arith.addf %26, %27 : vector<8x256xf32>
    %c0_17 = arith.constant 0 : index
    %c0_18 = arith.constant 0 : index
    %29 = vector.load %arg18[%c0_17, %c0_18] : memref<8x256xf32, #tpu.memory_space<vmem>>, vector<8x256xf32>
    tpu.vector_store %arg18[%c0_17, %c0_18], %28 {strides = array<i32>} : memref<8x256xf32, #tpu.memory_space<vmem>>, vector<8x256xf32>,
    %c0_i32_19 = arith.constant 0 : i32
    %30 = arith.cmpi eq, %arg1, %c0_i32_19 : i32
    %31 = arith.extui %30 : i1 to i32
    %c0_i32_20 = arith.constant 0 : i32
    %32 = arith.cmpi ne, %31, %c0_i32_20 : i32
    scf.if %32 {
      %c0_21 = arith.constant 0 : index
      %c0_22 = arith.constant 0 : index
      %33 = vector.load %arg17[%c0_21, %c0_22] : memref<8x256xf32, #tpu.memory_space<vmem>>, vector<8x256xf32>
      %c0_23 = arith.constant 0 : index
      %c0_24 = arith.constant 0 : index
      %c0_25 = arith.constant 0 : index
      %34 = vector.load %arg6[%c0_23, %c0_24, %c0_25] : memref<2x8x1xf32, #tpu.memory_space<vmem>>, vector<1x8x1xf32>
      %35 = vector.shape_cast %34 : vector<1x8x1xf32> to vector<8x1xf32>
      %36 = vector.broadcast %35 : vector<8x1xf32> to vector<8x256xf32>
      %37 = arith.mulf %33, %36 : vector<8x256xf32>
      %c0_26 = arith.constant 0 : index
      %c0_27 = arith.constant 0 : index
      %38 = vector.load %arg18[%c0_26, %c0_27] : memref<8x256xf32, #tpu.memory_space<vmem>>, vector<8x256xf32>
      %c1 = arith.constant 1 : index
      %c0_28 = arith.constant 0 : index
      %c0_29 = arith.constant 0 : index
      %39 = vector.load %arg6[%c1, %c0_28, %c0_29] : memref<2x8x1xf32, #tpu.memory_space<vmem>>, vector<1x8x1xf32>
      %40 = vector.shape_cast %39 : vector<1x8x1xf32> to vector<8x1xf32>
      %41 = vector.broadcast %40 : vector<8x1xf32> to vector<8x256xf32>
      %42 = arith.mulf %38, %41 : vector<8x256xf32>
      %c0_30 = arith.constant 0 : index
      %c0_31 = arith.constant 0 : index
      %c0_32 = arith.constant 0 : index
      %43 = vector.load %arg2[%c0_30, %c0_31, %c0_32] : memref<2x8x128xbf16, #tpu.memory_space<vmem>>, vector<1x8x128xbf16>
      %44 = vector.shape_cast %43 : vector<1x8x128xbf16> to vector<8x128xbf16>
      %c0_33 = arith.constant 0 : index
      %c0_34 = arith.constant 0 : index
      %45 = vector.load %arg7[%c0_33, %c0_34] : memref<128x128xbf16, #tpu.memory_space<vmem>>, vector<128x128xbf16>
      %cst_35 = arith.constant dense<0.000000e+00> : vector<8x128xf32>
      %46 = tpu.matmul %44, %45, %cst_35 {dimension_numbers = #tpu.dot_dimension_numbers<[1], [0], [0], [1], [0, 0, 1, 1], [], []>} : vector<8x128xbf16>, vector<128x128xbf16>, vector<8x128xf32> -> vector<8x128xf32>
      %c1_36 = arith.constant 1 : index
      %c0_37 = arith.constant 0 : index
      %c0_38 = arith.constant 0 : index
      %47 = vector.load %arg2[%c1_36, %c0_37, %c0_38] : memref<2x8x128xbf16, #tpu.memory_space<vmem>>, vector<1x8x128xbf16>
      %48 = vector.shape_cast %47 : vector<1x8x128xbf16> to vector<8x128xbf16>
      %c0_39 = arith.constant 0 : index
      %c0_40 = arith.constant 0 : index
      %49 = vector.load %arg7[%c0_39, %c0_40] : memref<128x128xbf16, #tpu.memory_space<vmem>>, vector<128x128xbf16>
      %cst_41 = arith.constant dense<0.000000e+00> : vector<8x128xf32>
      %50 = tpu.matmul %48, %49, %cst_41 {dimension_numbers = #tpu.dot_dimension_numbers<[1], [0], [0], [1], [0, 0, 1, 1], [], []>} : vector<8x128xbf16>, vector<128x128xbf16>, vector<8x128xf32> -> vector<8x128xf32>
      %51 = arith.truncf %37 : vector<8x256xf32> to vector<8x256xbf16>
      %c0_42 = arith.constant 0 : index
      %c0_43 = arith.constant 0 : index
      %52 = vector.load %arg8[%c0_42, %c0_43] : memref<256x128xbf16, #tpu.memory_space<vmem>>, vector<256x128xbf16>
      %cst_44 = arith.constant dense<0.000000e+00> : vector<8x128xf32>
      %53 = tpu.matmul %51, %52, %cst_44 {dimension_numbers = #tpu.dot_dimension_numbers<[1], [0], [0], [1], [0, 0, 1, 1], [], []>} : vector<8x256xbf16>, vector<256x128xbf16>, vector<8x128xf32> -> vector<8x128xf32>
      %54 = arith.truncf %42 : vector<8x256xf32> to vector<8x256xbf16>
      %c0_45 = arith.constant 0 : index
      %c0_46 = arith.constant 0 : index
      %55 = vector.load %arg8[%c0_45, %c0_46] : memref<256x128xbf16, #tpu.memory_space<vmem>>, vector<256x128xbf16>
      %cst_47 = arith.constant dense<0.000000e+00> : vector<8x128xf32>
      %56 = tpu.matmul %54, %55, %cst_47 {dimension_numbers = #tpu.dot_dimension_numbers<[1], [0], [0], [1], [0, 0, 1, 1], [], []>} : vector<8x256xbf16>, vector<256x128xbf16>, vector<8x128xf32> -> vector<8x128xf32>
      %57 = arith.addf %46, %53 : vector<8x128xf32>
      %c0_48 = arith.constant 0 : index
      %c0_49 = arith.constant 0 : index
      %58 = vector.load %arg9[%c0_48, %c0_49] : memref<1x128xf32, #tpu.memory_space<vmem>>, vector<1x128xf32>
      %59 = vector.broadcast %58 : vector<1x128xf32> to vector<8x128xf32>
      %60 = arith.addf %57, %59 : vector<8x128xf32>
      %cst_50 = arith.constant 0.000000e+00 : f32
      %61 = vector.broadcast %cst_50 : f32 to vector<8x128xf32>
      %62 = arith.maximumf %60, %61 : vector<8x128xf32>
      %63 = arith.addf %50, %56 : vector<8x128xf32>
      %c0_51 = arith.constant 0 : index
      %c0_52 = arith.constant 0 : index
      %64 = vector.load %arg9[%c0_51, %c0_52] : memref<1x128xf32, #tpu.memory_space<vmem>>, vector<1x128xf32>
      %65 = vector.broadcast %64 : vector<1x128xf32> to vector<8x128xf32>
      %66 = arith.addf %63, %65 : vector<8x128xf32>
      %cst_53 = arith.constant 0.000000e+00 : f32
      %67 = vector.broadcast %cst_53 : f32 to vector<8x128xf32>
      %68 = arith.maximumf %66, %67 : vector<8x128xf32>
      %69 = arith.truncf %62 : vector<8x128xf32> to vector<8x128xbf16>
      %c0_54 = arith.constant 0 : index
      %c0_55 = arith.constant 0 : index
      %70 = vector.load %arg10[%c0_54, %c0_55] : memref<128x128xbf16, #tpu.memory_space<vmem>>, vector<128x128xbf16>
      %cst_56 = arith.constant dense<0.000000e+00> : vector<8x128xf32>
      %71 = tpu.matmul %69, %70, %cst_56 {dimension_numbers = #tpu.dot_dimension_numbers<[1], [0], [0], [1], [0, 0, 1, 1], [], []>} : vector<8x128xbf16>, vector<128x128xbf16>, vector<8x128xf32> -> vector<8x128xf32>
      %72 = arith.truncf %68 : vector<8x128xf32> to vector<8x128xbf16>
      %c0_57 = arith.constant 0 : index
      %c0_58 = arith.constant 0 : index
      %73 = vector.load %arg11[%c0_57, %c0_58] : memref<128x128xbf16, #tpu.memory_space<vmem>>, vector<128x128xbf16>
      %cst_59 = arith.constant dense<0.000000e+00> : vector<8x128xf32>
      %74 = tpu.matmul %72, %73, %cst_59 {dimension_numbers = #tpu.dot_dimension_numbers<[1], [0], [0], [1], [0, 0, 1, 1], [], []>} : vector<8x128xbf16>, vector<128x128xbf16>, vector<8x128xf32> -> vector<8x128xf32>
      %75 = arith.addf %71, %74 : vector<8x128xf32>
      %c0_60 = arith.constant 0 : index
      %c0_61 = arith.constant 0 : index
      %76 = vector.load %arg12[%c0_60, %c0_61] : memref<1x128xf32, #tpu.memory_space<vmem>>, vector<1x128xf32>
      %77 = vector.broadcast %76 : vector<1x128xf32> to vector<8x128xf32>
      %78 = arith.addf %75, %77 : vector<8x128xf32>
      %cst_62 = arith.constant 0.000000e+00 : f32
      %79 = vector.broadcast %cst_62 : f32 to vector<8x128xf32>
      %80 = arith.maximumf %78, %79 : vector<8x128xf32>
      %c0_63 = arith.constant 0 : index
      %c0_64 = arith.constant 0 : index
      %81 = vector.load %arg15[%c0_63, %c0_64] : memref<8x128xf32, #tpu.memory_space<vmem>>, vector<8x128xf32>
      tpu.vector_store %arg15[%c0_63, %c0_64], %80 {strides = array<i32>} : memref<8x128xf32, #tpu.memory_space<vmem>>, vector<8x128xf32>,
      %82 = arith.truncf %80 : vector<8x128xf32> to vector<8x128xbf16>
      %c0_65 = arith.constant 0 : index
      %c0_66 = arith.constant 0 : index
      %83 = vector.load %arg13[%c0_65, %c0_66] : memref<128x128xbf16, #tpu.memory_space<vmem>>, vector<128x128xbf16>
      %cst_67 = arith.constant dense<0.000000e+00> : vector<8x128xf32>
      %84 = tpu.matmul %82, %83, %cst_67 {dimension_numbers = #tpu.dot_dimension_numbers<[1], [0], [0], [1], [0, 0, 1, 1], [], []>} : vector<8x128xbf16>, vector<128x128xbf16>, vector<8x128xf32> -> vector<8x128xf32>
      %c0_68 = arith.constant 0 : index
      %c0_69 = arith.constant 0 : index
      %85 = vector.load %arg14[%c0_68, %c0_69] : memref<1x128xf32, #tpu.memory_space<vmem>>, vector<1x128xf32>
      %86 = vector.broadcast %85 : vector<1x128xf32> to vector<8x128xf32>
      %87 = arith.addf %84, %86 : vector<8x128xf32>
      %c0_70 = arith.constant 0 : index
      %c0_71 = arith.constant 0 : index
      %88 = vector.load %arg16[%c0_70, %c0_71] : memref<8x128xf32, #tpu.memory_space<vmem>>, vector<8x128xf32>
      tpu.vector_store %arg16[%c0_70, %c0_71], %87 {strides = array<i32>} : memref<8x128xf32, #tpu.memory_space<vmem>>, vector<8x128xf32>,
    } else {
    }
    return
  }
  func.func @transform_0(%arg0: i32, %arg1: i32) -> (i32, i32, i32) {
    %c0_i32 = arith.constant 0 : i32
    %c0_i32_0 = arith.constant 0 : i32
    %c0_i32_1 = arith.constant 0 : i32
    return %c0_i32, %arg0, %c0_i32_0 : i32, i32, i32
  }
  func.func @transform_1(%arg0: i32, %arg1: i32) -> (i32, i32) {
    %c0_i32 = arith.constant 0 : i32
    %c0_i32_0 = arith.constant 0 : i32
    return %arg1, %c0_i32 : i32, i32
  }
  func.func @transform_2(%arg0: i32, %arg1: i32) -> (i32, i32) {
    %c0_i32 = arith.constant 0 : i32
    %c0_i32_0 = arith.constant 0 : i32
    return %c0_i32, %arg1 : i32, i32
  }
  func.func @transform_3(%arg0: i32, %arg1: i32) -> (i32, i32) {
    %c0_i32 = arith.constant 0 : i32
    %c0_i32_0 = arith.constant 0 : i32
    return %c0_i32, %arg1 : i32, i32
  }
  func.func @transform_4(%arg0: i32, %arg1: i32) -> (i32, i32, i32) {
    %c0_i32 = arith.constant 0 : i32
    %c0_i32_0 = arith.constant 0 : i32
    %c0_i32_1 = arith.constant 0 : i32
    return %c0_i32, %arg0, %c0_i32_0 : i32, i32, i32
  }
  func.func @transform_5(%arg0: i32, %arg1: i32) -> (i32, i32) {
    %c0_i32 = arith.constant 0 : i32
    %c0_i32_0 = arith.constant 0 : i32
    %c0_i32_1 = arith.constant 0 : i32
    return %c0_i32, %c0_i32_0 : i32, i32
  }
  func.func @transform_6(%arg0: i32, %arg1: i32) -> (i32, i32) {
    %c0_i32 = arith.constant 0 : i32
    %c0_i32_0 = arith.constant 0 : i32
    %c0_i32_1 = arith.constant 0 : i32
    return %c0_i32, %c0_i32_0 : i32, i32
  }
  func.func @transform_7(%arg0: i32, %arg1: i32) -> (i32, i32) {
    %c0_i32 = arith.constant 0 : i32
    %c0_i32_0 = arith.constant 0 : i32
    %c0_i32_1 = arith.constant 0 : i32
    return %c0_i32, %c0_i32_0 : i32, i32
  }
  func.func @transform_8(%arg0: i32, %arg1: i32) -> (i32, i32) {
    %c0_i32 = arith.constant 0 : i32
    %c0_i32_0 = arith.constant 0 : i32
    %c0_i32_1 = arith.constant 0 : i32
    return %c0_i32, %c0_i32_0 : i32, i32
  }
  func.func @transform_9(%arg0: i32, %arg1: i32) -> (i32, i32) {
    %c0_i32 = arith.constant 0 : i32
    %c0_i32_0 = arith.constant 0 : i32
    %c0_i32_1 = arith.constant 0 : i32
    return %c0_i32, %c0_i32_0 : i32, i32
  }
  func.func @transform_10(%arg0: i32, %arg1: i32) -> (i32, i32) {
    %c0_i32 = arith.constant 0 : i32
    %c0_i32_0 = arith.constant 0 : i32
    %c0_i32_1 = arith.constant 0 : i32
    return %c0_i32, %c0_i32_0 : i32, i32
  }
  func.func @transform_11(%arg0: i32, %arg1: i32) -> (i32, i32) {
    %c0_i32 = arith.constant 0 : i32
    %c0_i32_0 = arith.constant 0 : i32
    %c0_i32_1 = arith.constant 0 : i32
    return %c0_i32, %c0_i32_0 : i32, i32
  }
  func.func @transform_12(%arg0: i32, %arg1: i32) -> (i32, i32) {
    %c0_i32 = arith.constant 0 : i32
    %c0_i32_0 = arith.constant 0 : i32
    %c0_i32_1 = arith.constant 0 : i32
    return %c0_i32, %c0_i32_0 : i32, i32
  }
  func.func @transform_13(%arg0: i32, %arg1: i32) -> (i32, i32) {
    %c0_i32 = arith.constant 0 : i32
    %c0_i32_0 = arith.constant 0 : i32
    return %arg0, %c0_i32 : i32, i32
  }
  func.func @transform_14(%arg0: i32, %arg1: i32) -> (i32, i32) {
    %c0_i32 = arith.constant 0 : i32
    %c0_i32_0 = arith.constant 0 : i32
    return %arg0, %c0_i32 : i32, i32
  }
}

</mosaic_0001>

<llo_original>
// kernel: custom-call
$region0: #{custom-call}
  %s0 = inlined_call_operand.vmem [shape: u32[10], index: 0, kind: output, shape index: {}]

// kernel: _summary_forward_jit.1
$region0: #{_summary_forward_jit.1}
  #allocation0 [shape = 'u32[]', space=smem, size = 0x4, offset = 0x4, fixed_abs, tag = 'smem constant byte address 0x4 - core index']
  #allocation1 [shape = 'u32[144,128]{1,0:T(1,128)}', space=vmem, size = 0x12000, scoped, tag = 'internal scratch']
  #allocation2 [shape = 'f32[8,256]{1,0:T(8,128)}', space=vmem, size = 0x2000, scoped, tag = 'scratch operand']
  #allocation3 [shape = 'f32[8,256]{1,0:T(8,128)}', space=vmem, size = 0x2000, scoped, tag = 'scratch operand']
  %s0 = inlined_call_operand.vmem [shape: bf16[2,8,128], index: 0, kind: input, shape index: {}]
  %s1 = inlined_call_operand.vmem [shape: bf16[128,256], index: 1, kind: input, shape index: {}]
  %s2 = inlined_call_operand.vmem [shape: s32[1,128], index: 2, kind: input, shape index: {}]
  %s3 = inlined_call_operand.vmem [shape: s32[1,128], index: 3, kind: input, shape index: {}]
  %s4 = inlined_call_operand.vmem [shape: f32[2,8,1], index: 4, kind: input, shape index: {}]
  %s5 = inlined_call_operand.vmem [shape: bf16[128,128], index: 5, kind: input, shape index: {}]
  %s6 = inlined_call_operand.vmem [shape: bf16[256,128], index: 6, kind: input, shape index: {}]
  %s7 = inlined_call_operand.vmem [shape: f32[1,128], index: 7, kind: input, shape index: {}]
  %s8 = inlined_call_operand.vmem [shape: bf16[128,128], index: 8, kind: input, shape index: {}]
  %s9 = inlined_call_operand.vmem [shape: bf16[128,128], index: 9, kind: input, shape index: {}]
  %s10 = inlined_call_operand.vmem [shape: f32[1,128], index: 10, kind: input, shape index: {}]
  %s11 = inlined_call_operand.vmem [shape: bf16[128,128], index: 11, kind: input, shape index: {}]
  %s12 = inlined_call_operand.vmem [shape: f32[1,128], index: 12, kind: input, shape index: {}]
  %s13 = inlined_call_operand.vmem [shape: f32[8,128], index: 13, kind: output, shape index: {0}]
  %s14 = inlined_call_operand.vmem [shape: f32[8,128], index: 14, kind: output, shape index: {1}]
  %15 = xla_tuple %s13, %s14
  %s16 = sld [smem:[#allocation0]]
  $region78: #{_summary_forward_jit.1} parent=0
    _
  %s18 = ssub.s32 1, %s16
  %s19 = scalar_select 0, %s18, %s16
  // Predicated region
  $region2: #{_summary_forward_jit.1} parent=0 // pred_check
    _
  $region3: #{_summary_forward_jit.1} parent=0 // pred_check_branch
    %21 = sbr.rel (0) target = $region5
  $region4: #{_summary_forward_jit.1} parent=0 // pred_region
    _
  $region5: #{_summary_forward_jit.1} parent=0 // pred_fallthru
    _
  // Predicated region
  $region6: #{_summary_forward_jit.1} parent=0 // pred_check
    _
  $region7: #{_summary_forward_jit.1} parent=0 // pred_check_branch
    %23 = sbr.rel (0) target = $region9
  $region8: #{_summary_forward_jit.1} parent=0 // pred_region
    _
  $region9: #{_summary_forward_jit.1} parent=0 // pred_fallthru
    _
  // Predicated region
  $region10: #{_summary_forward_jit.1} parent=0 // pred_check
    _
  $region11: #{_summary_forward_jit.1} parent=0 // pred_check_branch
    %25 = sbr.rel (0) target = $region13
  $region12: #{_summary_forward_jit.1} parent=0 // pred_region
    _
  $region13: #{_summary_forward_jit.1} parent=0 // pred_fallthru
    _
  // Predicated region
  $region14: #{_summary_forward_jit.1} parent=0 // pred_check
    _
  $region15: #{_summary_forward_jit.1} parent=0 // pred_check_branch
    %27 = sbr.rel (0) target = $region17
  $region16: #{_summary_forward_jit.1} parent=0 // pred_region
    _
  $region17: #{_summary_forward_jit.1} parent=0 // pred_fallthru
    _
  // Predicated region
  $region18: #{_summary_forward_jit.1} parent=0 // pred_check
    _
  $region19: #{_summary_forward_jit.1} parent=0 // pred_check_branch
    %29 = sbr.rel (0) target = $region21
  $region20: #{_summary_forward_jit.1} parent=0 // pred_region
    _
  $region21: #{_summary_forward_jit.1} parent=0 // pred_fallthru
    _
  // Predicated region
  $region22: #{_summary_forward_jit.1} parent=0 // pred_check
    _
  $region23: #{_summary_forward_jit.1} parent=0 // pred_check_branch
    %31 = sbr.rel (0) target = $region25
  $region24: #{_summary_forward_jit.1} parent=0 // pred_region
    _
  $region25: #{_summary_forward_jit.1} parent=0 // pred_fallthru
    _
  // Predicated region
  $region26: #{_summary_forward_jit.1} parent=0 // pred_check
    _
  $region27: #{_summary_forward_jit.1} parent=0 // pred_check_branch
    %33 = sbr.rel (0) target = $region29
  $region28: #{_summary_forward_jit.1} parent=0 // pred_region
    _
  $region29: #{_summary_forward_jit.1} parent=0 // pred_fallthru
    _
  // Predicated region
  $region30: #{_summary_forward_jit.1} parent=0 // pred_check
    _
  $region31: #{_summary_forward_jit.1} parent=0 // pred_check_branch
    %35 = sbr.rel (0) target = $region33
  $region32: #{_summary_forward_jit.1} parent=0 // pred_region
    _
  $region33: #{_summary_forward_jit.1} parent=0 // pred_fallthru
    _
  // Predicated region
  $region34: #{_summary_forward_jit.1} parent=0 // pred_check
    _
  $region35: #{_summary_forward_jit.1} parent=0 // pred_check_branch
    %37 = sbr.rel (0) target = $region37
  $region36: #{_summary_forward_jit.1} parent=0 // pred_region
    _
  $region37: #{_summary_forward_jit.1} parent=0 // pred_fallthru
    _
  // Predicated region
  $region38: #{_summary_forward_jit.1} parent=0 // pred_check
    _
  $region39: #{_summary_forward_jit.1} parent=0 // pred_check_branch
    %39 = sbr.rel (0) target = $region41
  $region40: #{_summary_forward_jit.1} parent=0 // pred_region
    _
  $region41: #{_summary_forward_jit.1} parent=0 // pred_fallthru
    _
  // Predicated region
  $region42: #{_summary_forward_jit.1} parent=0 // pred_check
    _
  $region43: #{_summary_forward_jit.1} parent=0 // pred_check_branch
    %41 = sbr.rel (0) target = $region45
  $region44: #{_summary_forward_jit.1} parent=0 // pred_region
    _
  $region45: #{_summary_forward_jit.1} parent=0 // pred_fallthru
    _
  // Predicated region
  $region46: #{_summary_forward_jit.1} parent=0 // pred_check
    _
  $region47: #{_summary_forward_jit.1} parent=0 // pred_check_branch
    %43 = sbr.rel (0) target = $region49
  $region48: #{_summary_forward_jit.1} parent=0 // pred_region
    _
  $region49: #{_summary_forward_jit.1} parent=0 // pred_fallthru
    _
  // Predicated region
  $region50: #{_summary_forward_jit.1} parent=0 // pred_check
    _
  $region51: #{_summary_forward_jit.1} parent=0 // pred_check_branch
    %45 = sbr.rel (0) target = $region53
  $region52: #{_summary_forward_jit.1} parent=0 // pred_region
    _
  $region53: #{_summary_forward_jit.1} parent=0 // pred_fallthru
    _
  %p47 = scmp.eq.s32.totalorder 0, 0
  // Predicated region
  $region54: #{_summary_forward_jit.1} parent=0 // pred_check
    %p48 = pneg %p47
  $region55: #{_summary_forward_jit.1} parent=0 // pred_check_branch
    %50 = sbr.rel (%p48) target = $region57
  $region56: #{_summary_forward_jit.1} parent=0 // pred_region
    %51 = vst [vmem:[#allocation2] sm:$0xff] 0.0
    %52 = vst [vmem:[#allocation2 + $0x8] sm:$0xff] 0.0
    %53 = vst [vmem:[#allocation3] sm:$0xff] 0.0
    %54 = vst [vmem:[#allocation3 + $0x8] sm:$0xff] 0.0
  $region57: #{_summary_forward_jit.1} parent=0 // pred_fallthru
    _
  %s55 = smul.u32 0, 8
  %v56 = vlaneseq
  %v57 = vshrl.u32 %v56, 7
  %v58 = vstv %s55
  %v59 = vadd.s32 %v58, %v57
  %v60 = vld [vmem:[%s2] sm:$0x1]
  %v61 = vlaneseq
  %v62 = vshrl.u32 %v61, 7
  %v63 = vsub.s32 0, %v62
  %v64 = vrot.slane %v60, %v63
  %vm65 = vcmp.eq.s32.totalorder %v64, %v59
  %v66 = vsel %vm65, 1.0, 0.0
  %v67 = vpack.c.bf16 %v66, %v66
  %v68 = vld [vmem:[%s3] sm:$0x1]
  %v69 = vlaneseq
  %v70 = vshrl.u32 %v69, 7
  %v71 = vsub.s32 0, %v70
  %v72 = vrot.slane %v68, %v71
  %vm73 = vcmp.eq.s32.totalorder %v72, %v59
  %v74 = vsel %vm73, 1.0, 0.0
  %v75 = vpack.c.bf16 %v74, %v74
  %v76 = vld [vmem:[%s1] sm:$0xff]
  %v77 = vld [vmem:[%s1 + $0x8] sm:$0xff]
  %v78 = vld [vmem:[%s1 + $0x10] sm:$0xff]
  %v79 = vld [vmem:[%s1 + $0x18] sm:$0xff]
  %v80 = vld [vmem:[%s1 + $0x20] sm:$0xff]
  %v81 = vld [vmem:[%s1 + $0x28] sm:$0xff]
  %v82 = vld [vmem:[%s1 + $0x30] sm:$0xff]
  %v83 = vld [vmem:[%s1 + $0x38] sm:$0xff]
  %v84 = vld [vmem:[%s1 + $0x40] sm:$0xff]
  %v85 = vld [vmem:[%s1 + $0x48] sm:$0xff]
  %v86 = vld [vmem:[%s1 + $0x50] sm:$0xff]
  %v87 = vld [vmem:[%s1 + $0x58] sm:$0xff]
  %v88 = vld [vmem:[%s1 + $0x60] sm:$0xff]
  %v89 = vld [vmem:[%s1 + $0x68] sm:$0xff]
  %v90 = vld [vmem:[%s1 + $0x70] sm:$0xff]
  %v91 = vld [vmem:[%s1 + $0x78] sm:$0xff]
  %v92 = vld [vmem:[#allocation2] sm:$0xff]
  %v93 = vld [vmem:[#allocation2 + $0x8] sm:$0xff]
  %v110 = vunpack.c.l.b16 %v76
  %v111 = vunpack.c.h.b16 %v76
  %v112 = vunpack.c.l.b16 %v77
  %v113 = vunpack.c.h.b16 %v77
  %v114 = vunpack.c.l.b16 %v78
  %v115 = vunpack.c.h.b16 %v78
  %v116 = vunpack.c.l.b16 %v79
  %v117 = vunpack.c.h.b16 %v79
  %v118 = vunpack.c.l.b16 %v80
  %v119 = vunpack.c.h.b16 %v80
  %v120 = vunpack.c.l.b16 %v81
  %v121 = vunpack.c.h.b16 %v81
  %v122 = vunpack.c.l.b16 %v82
  %v123 = vunpack.c.h.b16 %v82
  %v124 = vunpack.c.l.b16 %v83
  %v125 = vunpack.c.h.b16 %v83
  %v126 = vunpack.c.l.b16 %v84
  %v127 = vunpack.c.h.b16 %v84
  %v128 = vunpack.c.l.b16 %v85
  %v129 = vunpack.c.h.b16 %v85
  %v130 = vunpack.c.l.b16 %v86
  %v131 = vunpack.c.h.b16 %v86
  %v132 = vunpack.c.l.b16 %v87
  %v133 = vunpack.c.h.b16 %v87
  %v134 = vunpack.c.l.b16 %v88
  %v135 = vunpack.c.h.b16 %v88
  %v136 = vunpack.c.l.b16 %v89
  %v137 = vunpack.c.h.b16 %v89
  %v138 = vunpack.c.l.b16 %v90
  %v139 = vunpack.c.h.b16 %v90
  %v140 = vunpack.c.l.b16 %v91
  %v141 = vunpack.c.h.b16 %v91
  %v142 = vpack.c.b16 %v112, %v110
  %v143 = vpack.c.b16 %v113, %v111
  %v144 = vpack.c.b16 %v116, %v114
  %v145 = vpack.c.b16 %v117, %v115
  %v146 = vpack.c.b16 %v120, %v118
  %v147 = vpack.c.b16 %v121, %v119
  %v148 = vpack.c.b16 %v124, %v122
  %v149 = vpack.c.b16 %v125, %v123
  %v150 = vpack.c.b16 %v128, %v126
  %v151 = vpack.c.b16 %v129, %v127
  %v152 = vpack.c.b16 %v132, %v130
  %v153 = vpack.c.b16 %v133, %v131
  %v154 = vpack.c.b16 %v136, %v134
  %v155 = vpack.c.b16 %v137, %v135
  %v156 = vpack.c.b16 %v140, %v138
  %v157 = vpack.c.b16 %v141, %v139
  %174 = vmatprep.subr.bf16.mxu0 %v143
  %175 = vmatpush1.bf16.msra.mxu0 %v142
  %176 = vmatprep.subr.bf16.mxu0 %v145
  %177 = vmatpush1.bf16.msra.mxu0 %v144
  %178 = vmatprep.subr.bf16.mxu0 %v147
  %179 = vmatpush1.bf16.msra.mxu0 %v146
  %180 = vmatprep.subr.bf16.mxu0 %v149
  %181 = vmatpush1.bf16.msra.mxu0 %v148
  %182 = vmatprep.subr.bf16.mxu0 %v151
  %183 = vmatpush1.bf16.msra.mxu0 %v150
  %184 = vmatprep.subr.bf16.mxu0 %v153
  %185 = vmatpush1.bf16.msra.mxu0 %v152
  %186 = vmatprep.subr.bf16.mxu0 %v155
  %187 = vmatpush1.bf16.msra.mxu0 %v154
  %188 = vmatprep.subr.bf16.mxu0 %v157
  %189 = vmatpush1.bf16.msra.mxu0 %v156
  %190 = vmatprep.subr.bf16.mxu0 0
  %191 = vmatpush1.bf16.msra.mxu0 0
  %192 = vmatprep.subr.bf16.mxu0 0
  %193 = vmatpush1.bf16.msra.mxu0 0
  %194 = vmatprep.subr.bf16.mxu0 0
  %195 = vmatpush1.bf16.msra.mxu0 0
  %196 = vmatprep.subr.bf16.mxu0 0
  %197 = vmatpush1.bf16.msra.mxu0 0
  %198 = vmatprep.subr.bf16.mxu0 0
  %199 = vmatpush1.bf16.msra.mxu0 0
  %200 = vmatprep.subr.bf16.mxu0 0
  %201 = vmatpush1.bf16.msra.mxu0 0
  %202 = vmatprep.subr.bf16.mxu0 0
  %203 = vmatpush1.bf16.msra.mxu0 0
  %204 = vmatprep.subr.bf16.mxu0 0
  %205 = vmatpush1.bf16.msra.mxu0 0
  %206 = vmatprep.mubr.bf16.mxu0 0
  %207 = vmatmul.mubr.bf16.gmra.mrb[0].mxu0 %v67
  %v208 = vpop.f32.mrb[0].mxu0
  %v209 = vadd.f32 0.0, %v208
  %v210 = vpop.f32.mrb[0].mxu0
  %v211 = vadd.f32 0.0, %v210
  %v212 = vpop.f32.mrb[0].mxu0
  %v213 = vpop.f32.mrb[0].mxu0
  %214 = vdwg.mxu0
  %v215 = vadd.f32 %v92, %v209
  %v216 = vadd.f32 %v93, %v211
  %217 = vst [vmem:[#allocation2] sm:$0xff] %v215
  %218 = vst [vmem:[#allocation2 + $0x8] sm:$0xff] %v216
  %v219 = vld [vmem:[#allocation3] sm:$0xff]
  %v220 = vld [vmem:[#allocation3 + $0x8] sm:$0xff]
  %221 = vmatprep.subr.bf16.mxu0 %v143
  %222 = vmatpush1.bf16.msra.mxu0 %v142
  %223 = vmatprep.subr.bf16.mxu0 %v145
  %224 = vmatpush1.bf16.msra.mxu0 %v144
  %225 = vmatprep.subr.bf16.mxu0 %v147
  %226 = vmatpush1.bf16.msra.mxu0 %v146
  %227 = vmatprep.subr.bf16.mxu0 %v149
  %228 = vmatpush1.bf16.msra.mxu0 %v148
  %229 = vmatprep.subr.bf16.mxu0 %v151
  %230 = vmatpush1.bf16.msra.mxu0 %v150
  %231 = vmatprep.subr.bf16.mxu0 %v153
  %232 = vmatpush1.bf16.msra.mxu0 %v152
  %233 = vmatprep.subr.bf16.mxu0 %v155
  %234 = vmatpush1.bf16.msra.mxu0 %v154
  %235 = vmatprep.subr.bf16.mxu0 %v157
  %236 = vmatpush1.bf16.msra.mxu0 %v156
  %237 = vmatprep.subr.bf16.mxu0 0
  %238 = vmatpush1.bf16.msra.mxu0 0
  %239 = vmatprep.subr.bf16.mxu0 0
  %240 = vmatpush1.bf16.msra.mxu0 0
  %241 = vmatprep.subr.bf16.mxu0 0
  %242 = vmatpush1.bf16.msra.mxu0 0
  %243 = vmatprep.subr.bf16.mxu0 0
  %244 = vmatpush1.bf16.msra.mxu0 0
  %245 = vmatprep.subr.bf16.mxu0 0
  %246 = vmatpush1.bf16.msra.mxu0 0
  %247 = vmatprep.subr.bf16.mxu0 0
  %248 = vmatpush1.bf16.msra.mxu0 0
  %249 = vmatprep.subr.bf16.mxu0 0
  %250 = vmatpush1.bf16.msra.mxu0 0
  %251 = vmatprep.subr.bf16.mxu0 0
  %252 = vmatpush1.bf16.msra.mxu0 0
  %253 = vmatprep.mubr.bf16.mxu0 0
  %254 = vmatmul.mubr.bf16.gmra.mrb[0].mxu0 %v75
  %v255 = vpop.f32.mrb[0].mxu0
  %v256 = vadd.f32 0.0, %v255
  %v257 = vpop.f32.mrb[0].mxu0
  %v258 = vadd.f32 0.0, %v257
  %v259 = vpop.f32.mrb[0].mxu0
  %v260 = vpop.f32.mrb[0].mxu0
  %261 = vdwg.mxu0
  %v262 = vadd.f32 %v219, %v256
  %v263 = vadd.f32 %v220, %v258
  %264 = vst [vmem:[#allocation3] sm:$0xff] %v262
  %265 = vst [vmem:[#allocation3 + $0x8] sm:$0xff] %v263
  // Predicated region
  $region58: #{_summary_forward_jit.1} parent=0 // pred_check
    %p266 = pneg %p47
  $region59: #{_summary_forward_jit.1} parent=0 // pred_check_branch
    %268 = sbr.rel (%p266) target = $region61
  $region60: #{_summary_forward_jit.1} parent=0 // pred_region
    %v269 = vld [vmem:[#allocation2] sm:$0xff]
    %v270 = vld [vmem:[#allocation2 + $0x8] sm:$0xff]
    %v271 = vld [vmem:[%s4] sm:$0xff]
    %273 = vset.pattern.permute.xlu0 0
    %274 = vperm.xlu0 %273, %v271
    %v275 = vpop.permute.xlu0 %274
    %v277 = vmul.f32 %v269, %v275
    %v278 = vmul.f32 %v270, %v275
    %v279 = vld [vmem:[#allocation3] sm:$0xff]
    %v280 = vld [vmem:[#allocation3 + $0x8] sm:$0xff]
    %s281 = scalar_lea.vmem %s4, 8
    %v282 = vld [vmem:[%s281] sm:$0xff]
    %284 = vset.pattern.permute.xlu0 0
    %285 = vperm.xlu0 %284, %v282
    %v286 = vpop.permute.xlu0 %285
    %v288 = vmul.f32 %v279, %v286
    %v289 = vmul.f32 %v280, %v286
    %v290 = vld [vmem:[%s0] sm:$0xf]
    %v291 = vld [vmem:[%s5] sm:$0xf]
    %v292 = vld [vmem:[%s5 + $0x4] sm:$0xf]
    %v293 = vld [vmem:[%s5 + $0x8] sm:$0xf]
    %v294 = vld [vmem:[%s5 + $0xc] sm:$0xf]
    %v295 = vld [vmem:[%s5 + $0x10] sm:$0xf]
    %v296 = vld [vmem:[%s5 + $0x14] sm:$0xf]
    %v297 = vld [vmem:[%s5 + $0x18] sm:$0xf]
    %v298 = vld [vmem:[%s5 + $0x1c] sm:$0xf]
    %v299 = vld [vmem:[%s5 + $0x20] sm:$0xf]
    %v300 = vld [vmem:[%s5 + $0x24] sm:$0xf]
    %v301 = vld [vmem:[%s5 + $0x28] sm:$0xf]
    %v302 = vld [vmem:[%s5 + $0x2c] sm:$0xf]
    %v303 = vld [vmem:[%s5 + $0x30] sm:$0xf]
    %v304 = vld [vmem:[%s5 + $0x34] sm:$0xf]
    %v305 = vld [vmem:[%s5 + $0x38] sm:$0xf]
    %v306 = vld [vmem:[%s5 + $0x3c] sm:$0xf]
    %s307 = scalar_lea.vmem %s0, 4
    %v308 = vld [vmem:[%s307] sm:$0xf]
    %v309 = vpack.c.bf16 %v277, %v277
    %v310 = vpack.c.bf16 %v278, %v278
    %v311 = vld [vmem:[%s6] sm:$0xf]
    %v312 = vld [vmem:[%s6 + $0x4] sm:$0xf]
    %v313 = vld [vmem:[%s6 + $0x8] sm:$0xf]
    %v314 = vld [vmem:[%s6 + $0xc] sm:$0xf]
    %v315 = vld [vmem:[%s6 + $0x10] sm:$0xf]
    %v316 = vld [vmem:[%s6 + $0x14] sm:$0xf]
    %v317 = vld [vmem:[%s6 + $0x18] sm:$0xf]
    %v318 = vld [vmem:[%s6 + $0x1c] sm:$0xf]
    %v319 = vld [vmem:[%s6 + $0x20] sm:$0xf]
    %v320 = vld [vmem:[%s6 + $0x24] sm:$0xf]
    %v321 = vld [vmem:[%s6 + $0x28] sm:$0xf]
    %v322 = vld [vmem:[%s6 + $0x2c] sm:$0xf]
    %v323 = vld [vmem:[%s6 + $0x30] sm:$0xf]
    %v324 = vld [vmem:[%s6 + $0x34] sm:$0xf]
    %v325 = vld [vmem:[%s6 + $0x38] sm:$0xf]
    %v326 = vld [vmem:[%s6 + $0x3c] sm:$0xf]
    %v327 = vld [vmem:[%s6 + $0x40] sm:$0xf]
    %v328 = vld [vmem:[%s6 + $0x44] sm:$0xf]
    %v329 = vld [vmem:[%s6 + $0x48] sm:$0xf]
    %v330 = vld [vmem:[%s6 + $0x4c] sm:$0xf]
    %v331 = vld [vmem:[%s6 + $0x50] sm:$0xf]
    %v332 = vld [vmem:[%s6 + $0x54] sm:$0xf]
    %v333 = vld [vmem:[%s6 + $0x58] sm:$0xf]
    %v334 = vld [vmem:[%s6 + $0x5c] sm:$0xf]
    %v335 = vld [vmem:[%s6 + $0x60] sm:$0xf]
    %v336 = vld [vmem:[%s6 + $0x64] sm:$0xf]
    %v337 = vld [vmem:[%s6 + $0x68] sm:$0xf]
    %v338 = vld [vmem:[%s6 + $0x6c] sm:$0xf]
    %v339 = vld [vmem:[%s6 + $0x70] sm:$0xf]
    %v340 = vld [vmem:[%s6 + $0x74] sm:$0xf]
    %v341 = vld [vmem:[%s6 + $0x78] sm:$0xf]
    %v342 = vld [vmem:[%s6 + $0x7c] sm:$0xf]
    %v375 = vunpack.c.l.b16 %v311
    %v376 = vunpack.c.l.b16 %v312
    %v377 = vunpack.c.l.b16 %v313
    %v378 = vunpack.c.l.b16 %v314
    %v379 = vunpack.c.l.b16 %v315
    %v380 = vunpack.c.l.b16 %v316
    %v381 = vunpack.c.l.b16 %v317
    %v382 = vunpack.c.l.b16 %v318
    %v383 = vunpack.c.l.b16 %v319
    %v384 = vunpack.c.l.b16 %v320
    %v385 = vunpack.c.l.b16 %v321
    %v386 = vunpack.c.l.b16 %v322
    %v387 = vunpack.c.l.b16 %v323
    %v388 = vunpack.c.l.b16 %v324
    %v389 = vunpack.c.l.b16 %v325
    %v390 = vunpack.c.l.b16 %v326
    %v391 = vunpack.c.l.b16 %v327
    %v392 = vunpack.c.l.b16 %v328
    %v393 = vunpack.c.l.b16 %v329
    %v394 = vunpack.c.l.b16 %v330
    %v395 = vunpack.c.l.b16 %v331
    %v396 = vunpack.c.l.b16 %v332
    %v397 = vunpack.c.l.b16 %v333
    %v398 = vunpack.c.l.b16 %v334
    %v399 = vunpack.c.l.b16 %v335
    %v400 = vunpack.c.l.b16 %v336
    %v401 = vunpack.c.l.b16 %v337
    %v402 = vunpack.c.l.b16 %v338
    %v403 = vunpack.c.l.b16 %v339
    %v404 = vunpack.c.l.b16 %v340
    %v405 = vunpack.c.l.b16 %v341
    %v406 = vunpack.c.l.b16 %v342
    %v407 = vpack.c.b16 %v376, %v375
    %v408 = vpack.c.b16 %v378, %v377
    %v409 = vpack.c.b16 %v380, %v379
    %v410 = vpack.c.b16 %v382, %v381
    %v411 = vpack.c.b16 %v384, %v383
    %v412 = vpack.c.b16 %v386, %v385
    %v413 = vpack.c.b16 %v388, %v387
    %v414 = vpack.c.b16 %v390, %v389
    %v415 = vpack.c.b16 %v392, %v391
    %v416 = vpack.c.b16 %v394, %v393
    %v417 = vpack.c.b16 %v396, %v395
    %v418 = vpack.c.b16 %v398, %v397
    %v419 = vpack.c.b16 %v400, %v399
    %v420 = vpack.c.b16 %v402, %v401
    %v421 = vpack.c.b16 %v404, %v403
    %v422 = vpack.c.b16 %v406, %v405
    %439 = vmatprep.subr.bf16.mxu0 0
    %440 = vmatpush1.bf16.msra.mxu0 %v407
    %441 = vmatprep.subr.bf16.mxu0 0
    %442 = vmatpush1.bf16.msra.mxu0 %v408
    %443 = vmatprep.subr.bf16.mxu0 0
    %444 = vmatpush1.bf16.msra.mxu0 %v409
    %445 = vmatprep.subr.bf16.mxu0 0
    %446 = vmatpush1.bf16.msra.mxu0 %v410
    %447 = vmatprep.subr.bf16.mxu0 0
    %448 = vmatpush1.bf16.msra.mxu0 %v411
    %449 = vmatprep.subr.bf16.mxu0 0
    %450 = vmatpush1.bf16.msra.mxu0 %v412
    %451 = vmatprep.subr.bf16.mxu0 0
    %452 = vmatpush1.bf16.msra.mxu0 %v413
    %453 = vmatprep.subr.bf16.mxu0 0
    %454 = vmatpush1.bf16.msra.mxu0 %v414
    %455 = vmatprep.subr.bf16.mxu0 0
    %456 = vmatpush1.bf16.msra.mxu0 %v415
    %457 = vmatprep.subr.bf16.mxu0 0
    %458 = vmatpush1.bf16.msra.mxu0 %v416
    %459 = vmatprep.subr.bf16.mxu0 0
    %460 = vmatpush1.bf16.msra.mxu0 %v417
    %461 = vmatprep.subr.bf16.mxu0 0
    %462 = vmatpush1.bf16.msra.mxu0 %v418
    %463 = vmatprep.subr.bf16.mxu0 0
    %464 = vmatpush1.bf16.msra.mxu0 %v419
    %465 = vmatprep.subr.bf16.mxu0 0
    %466 = vmatpush1.bf16.msra.mxu0 %v420
    %467 = vmatprep.subr.bf16.mxu0 0
    %468 = vmatpush1.bf16.msra.mxu0 %v421
    %469 = vmatprep.subr.bf16.mxu0 0
    %470 = vmatpush1.bf16.msra.mxu0 %v422
    %471 = vmatprep.mubr.bf16.mxu0 %v310
    %472 = vmatmul.mubr.bf16.gmra.mrb[0].mxu0 %v309
    %v473 = vpop.f32.mrb[0].mxu0
    %v474 = vadd.f32 0.0, %v473
    %v475 = vpop.f32.mrb[0].mxu0
    %v476 = vpop.f32.mrb[0].mxu0
    %v477 = vpop.f32.mrb[0].mxu0
    %478 = vdwg.mxu0
    %v479 = vpack.c.bf16 %v288, %v288
    %v480 = vpack.c.bf16 %v289, %v289
    %481 = vmatprep.subr.bf16.mxu0 0
    %482 = vmatpush1.bf16.msra.mxu0 %v407
    %483 = vmatprep.subr.bf16.mxu0 0
    %484 = vmatpush1.bf16.msra.mxu0 %v408
    %485 = vmatprep.subr.bf16.mxu0 0
    %486 = vmatpush1.bf16.msra.mxu0 %v409
    %487 = vmatprep.subr.bf16.mxu0 0
    %488 = vmatpush1.bf16.msra.mxu0 %v410
    %489 = vmatprep.subr.bf16.mxu0 0
    %490 = vmatpush1.bf16.msra.mxu0 %v411
    %491 = vmatprep.subr.bf16.mxu0 0
    %492 = vmatpush1.bf16.msra.mxu0 %v412
    %493 = vmatprep.subr.bf16.mxu0 0
    %494 = vmatpush1.bf16.msra.mxu0 %v413
    %495 = vmatprep.subr.bf16.mxu0 0
    %496 = vmatpush1.bf16.msra.mxu0 %v414
    %497 = vmatprep.subr.bf16.mxu0 0
    %498 = vmatpush1.bf16.msra.mxu0 %v415
    %499 = vmatprep.subr.bf16.mxu0 0
    %500 = vmatpush1.bf16.msra.mxu0 %v416
    %501 = vmatprep.subr.bf16.mxu0 0
    %502 = vmatpush1.bf16.msra.mxu0 %v417
    %503 = vmatprep.subr.bf16.mxu0 0
    %504 = vmatpush1.bf16.msra.mxu0 %v418
    %505 = vmatprep.subr.bf16.mxu0 0
    %506 = vmatpush1.bf16.msra.mxu0 %v419
    %507 = vmatprep.subr.bf16.mxu0 0
    %508 = vmatpush1.bf16.msra.mxu0 %v420
    %509 = vmatprep.subr.bf16.mxu0 0
    %510 = vmatpush1.bf16.msra.mxu0 %v421
    %511 = vmatprep.subr.bf16.mxu0 0
    %512 = vmatpush1.bf16.msra.mxu0 %v422
    %513 = vmatprep.mubr.bf16.mxu0 %v480
    %514 = vmatmul.mubr.bf16.gmra.mrb[0].mxu0 %v479
    %v515 = vpop.f32.mrb[0].mxu0
    %v516 = vadd.f32 0.0, %v515
    %v517 = vpop.f32.mrb[0].mxu0
    %v518 = vpop.f32.mrb[0].mxu0
    %v519 = vpop.f32.mrb[0].mxu0
    %520 = vdwg.mxu0
    %v537 = vunpack.c.l.b16 %v291
    %v538 = vunpack.c.l.b16 %v292
    %v539 = vunpack.c.l.b16 %v293
    %v540 = vunpack.c.l.b16 %v294
    %v541 = vunpack.c.l.b16 %v295
    %v542 = vunpack.c.l.b16 %v296
    %v543 = vunpack.c.l.b16 %v297
    %v544 = vunpack.c.l.b16 %v298
    %v545 = vunpack.c.l.b16 %v299
    %v546 = vunpack.c.l.b16 %v300
    %v547 = vunpack.c.l.b16 %v301
    %v548 = vunpack.c.l.b16 %v302
    %v549 = vunpack.c.l.b16 %v303
    %v550 = vunpack.c.l.b16 %v304
    %v551 = vunpack.c.l.b16 %v305
    %v552 = vunpack.c.l.b16 %v306
    %v553 = vpack.c.b16 %v538, %v537
    %v554 = vpack.c.b16 %v540, %v539
    %v555 = vpack.c.b16 %v542, %v541
    %v556 = vpack.c.b16 %v544, %v543
    %v557 = vpack.c.b16 %v546, %v545
    %v558 = vpack.c.b16 %v548, %v547
    %v559 = vpack.c.b16 %v550, %v549
    %v560 = vpack.c.b16 %v552, %v551
    %569 = vmatprep.subr.bf16.mxu0 0
    %570 = vmatpush1.bf16.msra.mxu0 %v553
    %571 = vmatprep.subr.bf16.mxu0 0
    %572 = vmatpush1.bf16.msra.mxu0 %v554
    %573 = vmatprep.subr.bf16.mxu0 0
    %574 = vmatpush1.bf16.msra.mxu0 %v555
    %575 = vmatprep.subr.bf16.mxu0 0
    %576 = vmatpush1.bf16.msra.mxu0 %v556
    %577 = vmatprep.subr.bf16.mxu0 0
    %578 = vmatpush1.bf16.msra.mxu0 %v557
    %579 = vmatprep.subr.bf16.mxu0 0
    %580 = vmatpush1.bf16.msra.mxu0 %v558
    %581 = vmatprep.subr.bf16.mxu0 0
    %582 = vmatpush1.bf16.msra.mxu0 %v559
    %583 = vmatprep.subr.bf16.mxu0 0
    %584 = vmatpush1.bf16.msra.mxu0 %v560
    %585 = vmatprep.subr.bf16.mxu0 0
    %586 = vmatpush1.bf16.msra.mxu0 0
    %587 = vmatprep.subr.bf16.mxu0 0
    %588 = vmatpush1.bf16.msra.mxu0 0
    %589 = vmatprep.subr.bf16.mxu0 0
    %590 = vmatpush1.bf16.msra.mxu0 0
    %591 = vmatprep.subr.bf16.mxu0 0
    %592 = vmatpush1.bf16.msra.mxu0 0
    %593 = vmatprep.subr.bf16.mxu0 0
    %594 = vmatpush1.bf16.msra.mxu0 0
    %595 = vmatprep.subr.bf16.mxu0 0
    %596 = vmatpush1.bf16.msra.mxu0 0
    %597 = vmatprep.subr.bf16.mxu0 0
    %598 = vmatpush1.bf16.msra.mxu0 0
    %599 = vmatprep.subr.bf16.mxu0 0
    %600 = vmatpush1.bf16.msra.mxu0 0
    %601 = vmatprep.mubr.bf16.mxu0 0
    %602 = vmatmul.mubr.bf16.gmra.mrb[0].mxu0 %v290
    %v603 = vpop.f32.mrb[0].mxu0
    %v604 = vadd.f32 %v474, %v603
    %v605 = vpop.f32.mrb[0].mxu0
    %v606 = vpop.f32.mrb[0].mxu0
    %v607 = vpop.f32.mrb[0].mxu0
    %608 = vdwg.mxu0
    %v609 = vld [vmem:[%s7] sm:$0x1]
    %v611 = vlaneseq
    %v612 = vshrl.u32 %v611, 7
    %v613 = vsub.s32 0, %v612
    %v614 = vrot.slane %v609, %v613
    %v616 = vadd.f32 %v604, %v614
    %v617 = vmax.f32 %v616, 0.0
    %618 = vmatprep.subr.bf16.mxu0 0
    %619 = vmatpush1.bf16.msra.mxu0 %v553
    %620 = vmatprep.subr.bf16.mxu0 0
    %621 = vmatpush1.bf16.msra.mxu0 %v554
    %622 = vmatprep.subr.bf16.mxu0 0
    %623 = vmatpush1.bf16.msra.mxu0 %v555
    %624 = vmatprep.subr.bf16.mxu0 0
    %625 = vmatpush1.bf16.msra.mxu0 %v556
    %626 = vmatprep.subr.bf16.mxu0 0
    %627 = vmatpush1.bf16.msra.mxu0 %v557
    %628 = vmatprep.subr.bf16.mxu0 0
    %629 = vmatpush1.bf16.msra.mxu0 %v558
    %630 = vmatprep.subr.bf16.mxu0 0
    %631 = vmatpush1.bf16.msra.mxu0 %v559
    %632 = vmatprep.subr.bf16.mxu0 0
    %633 = vmatpush1.bf16.msra.mxu0 %v560
    %634 = vmatprep.subr.bf16.mxu0 0
    %635 = vmatpush1.bf16.msra.mxu0 0
    %636 = vmatprep.subr.bf16.mxu0 0
    %637 = vmatpush1.bf16.msra.mxu0 0
    %638 = vmatprep.subr.bf16.mxu0 0
    %639 = vmatpush1.bf16.msra.mxu0 0
    %640 = vmatprep.subr.bf16.mxu0 0
    %641 = vmatpush1.bf16.msra.mxu0 0
    %642 = vmatprep.subr.bf16.mxu0 0
    %643 = vmatpush1.bf16.msra.mxu0 0
    %644 = vmatprep.subr.bf16.mxu0 0
    %645 = vmatpush1.bf16.msra.mxu0 0
    %646 = vmatprep.subr.bf16.mxu0 0
    %647 = vmatpush1.bf16.msra.mxu0 0
    %648 = vmatprep.subr.bf16.mxu0 0
    %649 = vmatpush1.bf16.msra.mxu0 0
    %650 = vmatprep.mubr.bf16.mxu0 0
    %651 = vmatmul.mubr.bf16.gmra.mrb[0].mxu0 %v308
    %v652 = vpop.f32.mrb[0].mxu0
    %v653 = vadd.f32 %v516, %v652
    %v654 = vpop.f32.mrb[0].mxu0
    %v655 = vpop.f32.mrb[0].mxu0
    %v656 = vpop.f32.mrb[0].mxu0
    %657 = vdwg.mxu0
    %v658 = vadd.f32 %v653, %v614
    %v659 = vmax.f32 %v658, 0.0
    %v660 = vpack.c.bf16 %v617, %v617
    %v661 = vld [vmem:[%s8] sm:$0xf]
    %v662 = vld [vmem:[%s8 + $0x4] sm:$0xf]
    %v663 = vld [vmem:[%s8 + $0x8] sm:$0xf]
    %v664 = vld [vmem:[%s8 + $0xc] sm:$0xf]
    %v665 = vld [vmem:[%s8 + $0x10] sm:$0xf]
    %v666 = vld [vmem:[%s8 + $0x14] sm:$0xf]
    %v667 = vld [vmem:[%s8 + $0x18] sm:$0xf]
    %v668 = vld [vmem:[%s8 + $0x1c] sm:$0xf]
    %v669 = vld [vmem:[%s8 + $0x20] sm:$0xf]
    %v670 = vld [vmem:[%s8 + $0x24] sm:$0xf]
    %v671 = vld [vmem:[%s8 + $0x28] sm:$0xf]
    %v672 = vld [vmem:[%s8 + $0x2c] sm:$0xf]
    %v673 = vld [vmem:[%s8 + $0x30] sm:$0xf]
    %v674 = vld [vmem:[%s8 + $0x34] sm:$0xf]
    %v675 = vld [vmem:[%s8 + $0x38] sm:$0xf]
    %v676 = vld [vmem:[%s8 + $0x3c] sm:$0xf]
    %v677 = vpack.c.bf16 %v659, %v659
    %v678 = vld [vmem:[%s9] sm:$0xf]
    %v679 = vld [vmem:[%s9 + $0x4] sm:$0xf]
    %v680 = vld [vmem:[%s9 + $0x8] sm:$0xf]
    %v681 = vld [vmem:[%s9 + $0xc] sm:$0xf]
    %v682 = vld [vmem:[%s9 + $0x10] sm:$0xf]
    %v683 = vld [vmem:[%s9 + $0x14] sm:$0xf]
    %v684 = vld [vmem:[%s9 + $0x18] sm:$0xf]
    %v685 = vld [vmem:[%s9 + $0x1c] sm:$0xf]
    %v686 = vld [vmem:[%s9 + $0x20] sm:$0xf]
    %v687 = vld [vmem:[%s9 + $0x24] sm:$0xf]
    %v688 = vld [vmem:[%s9 + $0x28] sm:$0xf]
    %v689 = vld [vmem:[%s9 + $0x2c] sm:$0xf]
    %v690 = vld [vmem:[%s9 + $0x30] sm:$0xf]
    %v691 = vld [vmem:[%s9 + $0x34] sm:$0xf]
    %v692 = vld [vmem:[%s9 + $0x38] sm:$0xf]
    %v693 = vld [vmem:[%s9 + $0x3c] sm:$0xf]
    %v710 = vunpack.c.l.b16 %v678
    %v711 = vunpack.c.l.b16 %v679
    %v712 = vunpack.c.l.b16 %v680
    %v713 = vunpack.c.l.b16 %v681
    %v714 = vunpack.c.l.b16 %v682
    %v715 = vunpack.c.l.b16 %v683
    %v716 = vunpack.c.l.b16 %v684
    %v717 = vunpack.c.l.b16 %v685
    %v718 = vunpack.c.l.b16 %v686
    %v719 = vunpack.c.l.b16 %v687
    %v720 = vunpack.c.l.b16 %v688
    %v721 = vunpack.c.l.b16 %v689
    %v722 = vunpack.c.l.b16 %v690
    %v723 = vunpack.c.l.b16 %v691
    %v724 = vunpack.c.l.b16 %v692
    %v725 = vunpack.c.l.b16 %v693
    %v726 = vpack.c.b16 %v711, %v710
    %v727 = vpack.c.b16 %v713, %v712
    %v728 = vpack.c.b16 %v715, %v714
    %v729 = vpack.c.b16 %v717, %v716
    %v730 = vpack.c.b16 %v719, %v718
    %v731 = vpack.c.b16 %v721, %v720
    %v732 = vpack.c.b16 %v723, %v722
    %v733 = vpack.c.b16 %v725, %v724
    %742 = vmatprep.subr.bf16.mxu0 0
    %743 = vmatpush1.bf16.msra.mxu0 %v726
    %744 = vmatprep.subr.bf16.mxu0 0
    %745 = vmatpush1.bf16.msra.mxu0 %v727
    %746 = vmatprep.subr.bf16.mxu0 0
    %747 = vmatpush1.bf16.msra.mxu0 %v728
    %748 = vmatprep.subr.bf16.mxu0 0
    %749 = vmatpush1.bf16.msra.mxu0 %v729
    %750 = vmatprep.subr.bf16.mxu0 0
    %751 = vmatpush1.bf16.msra.mxu0 %v730
    %752 = vmatprep.subr.bf16.mxu0 0
    %753 = vmatpush1.bf16.msra.mxu0 %v731
    %754 = vmatprep.subr.bf16.mxu0 0
    %755 = vmatpush1.bf16.msra.mxu0 %v732
    %756 = vmatprep.subr.bf16.mxu0 0
    %757 = vmatpush1.bf16.msra.mxu0 %v733
    %758 = vmatprep.subr.bf16.mxu0 0
    %759 = vmatpush1.bf16.msra.mxu0 0
    %760 = vmatprep.subr.bf16.mxu0 0
    %761 = vmatpush1.bf16.msra.mxu0 0
    %762 = vmatprep.subr.bf16.mxu0 0
    %763 = vmatpush1.bf16.msra.mxu0 0
    %764 = vmatprep.subr.bf16.mxu0 0
    %765 = vmatpush1.bf16.msra.mxu0 0
    %766 = vmatprep.subr.bf16.mxu0 0
    %767 = vmatpush1.bf16.msra.mxu0 0
    %768 = vmatprep.subr.bf16.mxu0 0
    %769 = vmatpush1.bf16.msra.mxu0 0
    %770 = vmatprep.subr.bf16.mxu0 0
    %771 = vmatpush1.bf16.msra.mxu0 0
    %772 = vmatprep.subr.bf16.mxu0 0
    %773 = vmatpush1.bf16.msra.mxu0 0
    %774 = vmatprep.mubr.bf16.mxu0 0
    %775 = vmatmul.mubr.bf16.gmra.mrb[0].mxu0 %v677
    %v776 = vpop.f32.mrb[0].mxu0
    %v777 = vadd.f32 0.0, %v776
    %v778 = vpop.f32.mrb[0].mxu0
    %v779 = vpop.f32.mrb[0].mxu0
    %v780 = vpop.f32.mrb[0].mxu0
    %781 = vdwg.mxu0
    %v798 = vunpack.c.l.b16 %v661
    %v799 = vunpack.c.l.b16 %v662
    %v800 = vunpack.c.l.b16 %v663
    %v801 = vunpack.c.l.b16 %v664
    %v802 = vunpack.c.l.b16 %v665
    %v803 = vunpack.c.l.b16 %v666
    %v804 = vunpack.c.l.b16 %v667
    %v805 = vunpack.c.l.b16 %v668
    %v806 = vunpack.c.l.b16 %v669
    %v807 = vunpack.c.l.b16 %v670
    %v808 = vunpack.c.l.b16 %v671
    %v809 = vunpack.c.l.b16 %v672
    %v810 = vunpack.c.l.b16 %v673
    %v811 = vunpack.c.l.b16 %v674
    %v812 = vunpack.c.l.b16 %v675
    %v813 = vunpack.c.l.b16 %v676
    %v814 = vpack.c.b16 %v799, %v798
    %v815 = vpack.c.b16 %v801, %v800
    %v816 = vpack.c.b16 %v803, %v802
    %v817 = vpack.c.b16 %v805, %v804
    %v818 = vpack.c.b16 %v807, %v806
    %v819 = vpack.c.b16 %v809, %v808
    %v820 = vpack.c.b16 %v811, %v810
    %v821 = vpack.c.b16 %v813, %v812
    %830 = vmatprep.subr.bf16.mxu0 0
    %831 = vmatpush1.bf16.msra.mxu0 %v814
    %832 = vmatprep.subr.bf16.mxu0 0
    %833 = vmatpush1.bf16.msra.mxu0 %v815
    %834 = vmatprep.subr.bf16.mxu0 0
    %835 = vmatpush1.bf16.msra.mxu0 %v816
    %836 = vmatprep.subr.bf16.mxu0 0
    %837 = vmatpush1.bf16.msra.mxu0 %v817
    %838 = vmatprep.subr.bf16.mxu0 0
    %839 = vmatpush1.bf16.msra.mxu0 %v818
    %840 = vmatprep.subr.bf16.mxu0 0
    %841 = vmatpush1.bf16.msra.mxu0 %v819
    %842 = vmatprep.subr.bf16.mxu0 0
    %843 = vmatpush1.bf16.msra.mxu0 %v820
    %844 = vmatprep.subr.bf16.mxu0 0
    %845 = vmatpush1.bf16.msra.mxu0 %v821
    %846 = vmatprep.subr.bf16.mxu0 0
    %847 = vmatpush1.bf16.msra.mxu0 0
    %848 = vmatprep.subr.bf16.mxu0 0
    %849 = vmatpush1.bf16.msra.mxu0 0
    %850 = vmatprep.subr.bf16.mxu0 0
    %851 = vmatpush1.bf16.msra.mxu0 0
    %852 = vmatprep.subr.bf16.mxu0 0
    %853 = vmatpush1.bf16.msra.mxu0 0
    %854 = vmatprep.subr.bf16.mxu0 0
    %855 = vmatpush1.bf16.msra.mxu0 0
    %856 = vmatprep.subr.bf16.mxu0 0
    %857 = vmatpush1.bf16.msra.mxu0 0
    %858 = vmatprep.subr.bf16.mxu0 0
    %859 = vmatpush1.bf16.msra.mxu0 0
    %860 = vmatprep.subr.bf16.mxu0 0
    %861 = vmatpush1.bf16.msra.mxu0 0
    %862 = vmatprep.mubr.bf16.mxu0 0
    %863 = vmatmul.mubr.bf16.gmra.mrb[0].mxu0 %v660
    %v864 = vpop.f32.mrb[0].mxu0
    %v865 = vadd.f32 %v777, %v864
    %v866 = vpop.f32.mrb[0].mxu0
    %v867 = vpop.f32.mrb[0].mxu0
    %v868 = vpop.f32.mrb[0].mxu0
    %869 = vdwg.mxu0
    %v870 = vld [vmem:[%s10] sm:$0x1]
    %v872 = vlaneseq
    %v873 = vshrl.u32 %v872, 7
    %v874 = vsub.s32 0, %v873
    %v875 = vrot.slane %v870, %v874
    %v877 = vadd.f32 %v865, %v875
    %v878 = vmax.f32 %v877, 0.0
    %879 = vst [vmem:[%s13] sm:$0xff] %v878
    %v880 = vpack.c.bf16 %v878, %v878
    %v881 = vld [vmem:[%s11] sm:$0xf]
    %v882 = vld [vmem:[%s11 + $0x4] sm:$0xf]
    %v883 = vld [vmem:[%s11 + $0x8] sm:$0xf]
    %v884 = vld [vmem:[%s11 + $0xc] sm:$0xf]
    %v885 = vld [vmem:[%s11 + $0x10] sm:$0xf]
    %v886 = vld [vmem:[%s11 + $0x14] sm:$0xf]
    %v887 = vld [vmem:[%s11 + $0x18] sm:$0xf]
    %v888 = vld [vmem:[%s11 + $0x1c] sm:$0xf]
    %v889 = vld [vmem:[%s11 + $0x20] sm:$0xf]
    %v890 = vld [vmem:[%s11 + $0x24] sm:$0xf]
    %v891 = vld [vmem:[%s11 + $0x28] sm:$0xf]
    %v892 = vld [vmem:[%s11 + $0x2c] sm:$0xf]
    %v893 = vld [vmem:[%s11 + $0x30] sm:$0xf]
    %v894 = vld [vmem:[%s11 + $0x34] sm:$0xf]
    %v895 = vld [vmem:[%s11 + $0x38] sm:$0xf]
    %v896 = vld [vmem:[%s11 + $0x3c] sm:$0xf]
    %v897 = vld [vmem:[%s12] sm:$0x1]
    %v899 = vlaneseq
    %v900 = vshrl.u32 %v899, 7
    %v901 = vsub.s32 0, %v900
    %v902 = vrot.slane %v897, %v901
    %v920 = vunpack.c.l.b16 %v881
    %v921 = vunpack.c.l.b16 %v882
    %v922 = vunpack.c.l.b16 %v883
    %v923 = vunpack.c.l.b16 %v884
    %v924 = vunpack.c.l.b16 %v885
    %v925 = vunpack.c.l.b16 %v886
    %v926 = vunpack.c.l.b16 %v887
    %v927 = vunpack.c.l.b16 %v888
    %v928 = vunpack.c.l.b16 %v889
    %v929 = vunpack.c.l.b16 %v890
    %v930 = vunpack.c.l.b16 %v891
    %v931 = vunpack.c.l.b16 %v892
    %v932 = vunpack.c.l.b16 %v893
    %v933 = vunpack.c.l.b16 %v894
    %v934 = vunpack.c.l.b16 %v895
    %v935 = vunpack.c.l.b16 %v896
    %v936 = vpack.c.b16 %v921, %v920
    %v937 = vpack.c.b16 %v923, %v922
    %v938 = vpack.c.b16 %v925, %v924
    %v939 = vpack.c.b16 %v927, %v926
    %v940 = vpack.c.b16 %v929, %v928
    %v941 = vpack.c.b16 %v931, %v930
    %v942 = vpack.c.b16 %v933, %v932
    %v943 = vpack.c.b16 %v935, %v934
    %952 = vmatprep.subr.bf16.mxu0 0
    %953 = vmatpush1.bf16.msra.mxu0 %v936
    %954 = vmatprep.subr.bf16.mxu0 0
    %955 = vmatpush1.bf16.msra.mxu0 %v937
    %956 = vmatprep.subr.bf16.mxu0 0
    %957 = vmatpush1.bf16.msra.mxu0 %v938
    %958 = vmatprep.subr.bf16.mxu0 0
    %959 = vmatpush1.bf16.msra.mxu0 %v939
    %960 = vmatprep.subr.bf16.mxu0 0
    %961 = vmatpush1.bf16.msra.mxu0 %v940
    %962 = vmatprep.subr.bf16.mxu0 0
    %963 = vmatpush1.bf16.msra.mxu0 %v941
    %964 = vmatprep.subr.bf16.mxu0 0
    %965 = vmatpush1.bf16.msra.mxu0 %v942
    %966 = vmatprep.subr.bf16.mxu0 0
    %967 = vmatpush1.bf16.msra.mxu0 %v943
    %968 = vmatprep.subr.bf16.mxu0 0
    %969 = vmatpush1.bf16.msra.mxu0 0
    %970 = vmatprep.subr.bf16.mxu0 0
    %971 = vmatpush1.bf16.msra.mxu0 0
    %972 = vmatprep.subr.bf16.mxu0 0
    %973 = vmatpush1.bf16.msra.mxu0 0
    %974 = vmatprep.subr.bf16.mxu0 0
    %975 = vmatpush1.bf16.msra.mxu0 0
    %976 = vmatprep.subr.bf16.mxu0 0
    %977 = vmatpush1.bf16.msra.mxu0 0
    %978 = vmatprep.subr.bf16.mxu0 0
    %979 = vmatpush1.bf16.msra.mxu0 0
    %980 = vmatprep.subr.bf16.mxu0 0
    %981 = vmatpush1.bf16.msra.mxu0 0
    %982 = vmatprep.subr.bf16.mxu0 0
    %983 = vmatpush1.bf16.msra.mxu0 0
    %984 = vmatprep.mubr.bf16.mxu0 0
    %985 = vmatmul.mubr.bf16.gmra.mrb[0].mxu0 %v880
    %v986 = vpop.f32.mrb[0].mxu0
    %v987 = vadd.f32 %v902, %v986
    %v988 = vpop.f32.mrb[0].mxu0
    %v989 = vpop.f32.mrb[0].mxu0
    %v990 = vpop.f32.mrb[0].mxu0
    %991 = vdwg.mxu0
    %992 = vst [vmem:[%s14] sm:$0xff] %v987
  $region61: #{_summary_forward_jit.1} parent=0 // pred_fallthru
    _
  // Predicated region
  $region62: #{_summary_forward_jit.1} parent=0 // pred_check
    _
  $region63: #{_summary_forward_jit.1} parent=0 // pred_check_branch
    %994 = sbr.rel (0) target = $region65
  $region64: #{_summary_forward_jit.1} parent=0 // pred_region
    _
  $region65: #{_summary_forward_jit.1} parent=0 // pred_fallthru
    _
  // Predicated region
  $region66: #{_summary_forward_jit.1} parent=0 // pred_check
    _
  $region67: #{_summary_forward_jit.1} parent=0 // pred_check_branch
    %996 = sbr.rel (0) target = $region69
  $region68: #{_summary_forward_jit.1} parent=0 // pred_region
    _
  $region69: #{_summary_forward_jit.1} parent=0 // pred_fallthru
    _
  // Predicated region
  $region70: #{_summary_forward_jit.1} parent=0 // pred_check
    _
  $region71: #{_summary_forward_jit.1} parent=0 // pred_check_branch
    %998 = sbr.rel (0) target = $region73
  $region72: #{_summary_forward_jit.1} parent=0 // pred_region
    _
  $region73: #{_summary_forward_jit.1} parent=0 // pred_fallthru
    _
  // Predicated region
  $region74: #{_summary_forward_jit.1} parent=0 // pred_check
    _
  $region75: #{_summary_forward_jit.1} parent=0 // pred_check_branch
    %1000 = sbr.rel (0) target = $region77
  $region76: #{_summary_forward_jit.1} parent=0 // pred_region
    _
  $region77: #{_summary_forward_jit.1} parent=0 // pred_fallthru
    _

</llo_original>
